<compile_context>
chip_gen: v7x
topology: tpu7x:2x2x1
jax: 0.10.0
libtpu: 0.0.40
codegen_flags: <defaults>
</compile_context>

<pallas_src>
import math

import jax
import jax.numpy as jnp
from jax.experimental import pallas as pl
from jax.experimental.pallas import tpu as pltpu


def _round_up(x: int, m: int) -> int:
    return (x + m - 1) // m * m


# --------------------------------------------------------------------------
# Kernel
# --------------------------------------------------------------------------
def sine_layer_kernel(x_ref, w_ref, b_ref, o_ref):
    # Cast the activation tile to the weight dtype on the VPU (no-op for
    # matching dtypes); MXU matmul accumulates in f32.
    x = x_ref[...].astype(w_ref.dtype)
    z = jnp.dot(x, w_ref[...], preferred_element_type=jnp.float32)
    z = z + b_ref[...]                         # (1, tn) broadcasts over rows
    o_ref[...] = jnp.sin(z).astype(o_ref.dtype)   # cast only on the store


# --------------------------------------------------------------------------
# Wrapper
# --------------------------------------------------------------------------
def sine_layer(x, w_t, b2, *, tm=512, tn=512, out_dtype=jnp.bfloat16):
    """y = sin(x @ w_t + b2) where omega_0 is already folded into (w_t, b2).

    x:   (M, K)  activations (any float dtype; cast to w_t.dtype in-kernel)
    w_t: (K, N)  prepared weights (see prepare_sine_layer_params)
    b2:  (1, N)  f32 prepared bias
    Returns (M, N) in out_dtype.
    """
    M, K = x.shape
    Kw, N = w_t.shape
    assert K == Kw, "in_dim mismatch between x and w_t"
    assert b2.shape == (1, N), "bias must be prepared as (1, N)"

    x_itm = jnp.dtype(x.dtype).itemsize
    w_itm = jnp.dtype(w_t.dtype).itemsize
    o_itm = jnp.dtype(out_dtype).itemsize

    # --- N tiling: keep the whole (K, N) weight resident when small (common
    # SIREN case) or when N is not lane-aligned; else lane-dense 128k tiles.
    if N % 128 != 0 or K * N * w_itm <= (8 << 20):
        tn = N
    else:
        tn = min(_round_up(tn, 128), N)

    # --- M tiling: big row tiles; force >= 2 row tiles for the 2 v7x TCs.
    tm = min(tm, _round_up(M, 8))
    if M > 8:
        tm = min(tm, _round_up(-(-M // 2), 8))

    # --- VMEM budget: double-buffered tiles must fit well under the v7x
    # 64 MiB physical VMEM; shrink tiles before raising the scoped limit.
    def est(tm_, tn_):
        return 2 * (tm_ * K * x_itm + K * tn_ * w_itm + tn_ * 4
                    + tm_ * tn_ * o_itm) + (2 << 20)

    VMEM_CAP = 48 << 20
    while est(tm, tn) > VMEM_CAP and tm > 256:
        tm = _round_up(tm // 2, 8)
    while est(tm, tn) > VMEM_CAP and tn > 128 and tn % 256 == 0:
        tn //= 2
    while est(tm, tn) > VMEM_CAP and tm > 8:
        tm = _round_up(tm // 2, 8)

    grid_m = pl.cdiv(M, tm)
    grid_n = pl.cdiv(N, tn)

    cp_kwargs = dict(dimension_semantics=("parallel", "parallel"))
    e = est(tm, tn)
    if e > (32 << 20):          # only raise the scoped limit when needed
        cp_kwargs["vmem_limit_bytes"] = int(e)

    cost = pl.CostEstimate(
        flops=2 * M * N * K,
        transcendentals=M * N,
        bytes_accessed=M * K * x_itm + K * N * w_itm + N * 4 + M * N * o_itm,
    )

    # Grid order: N OUTER, M INNER -> weight tile constant across the inner
    # M sweep (stays resident, no re-DMA); only the activation tile streams.
    return pl.pallas_call(
        sine_layer_kernel,
        out_shape=jax.ShapeDtypeStruct((M, N), out_dtype),
        grid_spec=pltpu.PrefetchScalarGridSpec(
            num_scalar_prefetch=0,
            grid=(grid_n, grid_m),
            in_specs=[
                # activation tile: (tm, K), varies with inner index i only
                pl.BlockSpec((tm, K), lambda j, i: (i, 0)),
                # weight column tile: (K, tn), varies with outer index j only
                pl.BlockSpec((K, tn), lambda j, i: (0, j)),
                # bias row tile: (1, tn)
                pl.BlockSpec((1, tn), lambda j, i: (0, j)),
            ],
            out_specs=pl.BlockSpec((tm, tn), lambda j, i: (i, j)),
        ),
        compiler_params=pltpu.CompilerParams(**cp_kwargs),
        cost_estimate=cost,
    )(x, w_t, b2)


# --------------------------------------------------------------------------
# One-time parameter preparation (fold omega_0, cast, lane-align bias)
# --------------------------------------------------------------------------
def prepare_sine_layer_params(w_t, b, omega_0, *, param_dtype=jnp.bfloat16):
    """Fold omega_0 into the linear params once; cast weights to the matmul
    dtype and reshape the bias to a (1, N) f32 row. Do this at init, not
    per call."""
    w_f = (omega_0 * w_t).astype(param_dtype)
    b_f = (omega_0 * b).astype(jnp.float32).reshape(1, -1)
    return w_f, b_f


def init_sine_layer_params(key, in_dim, out_dim, omega_0, is_first):
    """Init matching SineLayer.__init__; returns UNscaled (w_t, b)."""
    kw, kb = jax.random.split(key)
    if is_first:
        bound_w = 1.0 / in_dim
    else:
        bound_w = math.sqrt(6.0 / in_dim) / omega_0
    # weight stored transposed: (in_dim, out_dim)
    w_t = jax.random.uniform(
        kw, (in_dim, out_dim), dtype=jnp.float32, minval=-bound_w, maxval=bound_w
    )
    # nn.Linear default bias init: U(-1/sqrt(in_dim), 1/sqrt(in_dim))
    bound_b = 1.0 / math.sqrt(in_dim)
    b = jax.random.uniform(
        kb, (out_dim,), dtype=jnp.float32, minval=-bound_b, maxval=bound_b
    )
    return w_t, b


if __name__ == "__main__":
    key = jax.random.PRNGKey(0)
    k_x, k_p = jax.random.split(key)

    batch, in_dim, out_dim = 16, 32, 64
    omega_0, is_first = 30.0, True

    x = jax.random.normal(k_x, (batch, in_dim), dtype=jnp.float32)
    w_t, b = init_sine_layer_params(k_p, in_dim, out_dim, omega_0, is_first)

    # pure-JAX reference (original PyTorch module semantics)
    y_ref = jnp.sin(omega_0 * (x @ w_t + b))

    # f32 params + f32 output (e.g. final SIREN layer / accuracy path).
    # MXU f32 matmul is typically ~1e-5-accurate; tolerance relaxed to be
    # robust across TPU generations / precision defaults.
    w32, b32 = prepare_sine_layer_params(w_t, b, omega_0, param_dtype=jnp.float32)
    y_f32 = jax.block_until_ready(sine_layer(x, w32, b32, out_dtype=jnp.float32))
    assert y_f32.shape == (batch, out_dim)
    assert jnp.allclose(y_f32, y_ref, atol=5e-2), float(
        jnp.max(jnp.abs(y_f32 - y_ref)))

    # bf16 params + bf16 output (hidden-layer fast path: half the weight DMA
    # and half the output store traffic; feeds the next layer's bf16 matmul).
    wbf, bbf = prepare_sine_layer_params(w_t, b, omega_0, param_dtype=jnp.bfloat16)
    y_bf16 = jax.block_until_ready(sine_layer(x, wbf, bbf, out_dtype=jnp.bfloat16))
    assert y_bf16.shape == (batch, out_dim)
    assert jnp.allclose(y_bf16.astype(jnp.float32), y_ref, atol=1e-1), float(
        jnp.max(jnp.abs(y_bf16.astype(jnp.float32) - y_ref)))

    print("KERNEL_OK")
</pallas_src>

<mosaic_0001>
module attributes {stable_mosaic.version = 11 : i64} {
  func.func @sine_layer_kernel(%arg0: i32, %arg1: i32, %arg2: memref<8x32xf32, #tpu.memory_space<vmem>>, %arg3: memref<32x64xf32, #tpu.memory_space<vmem>>, %arg4: memref<1x64xf32, #tpu.memory_space<vmem>>, %arg5: memref<8x64xf32, #tpu.memory_space<vmem>>) attributes {dimension_semantics = [#tpu.dimension_semantics<parallel>, #tpu.dimension_semantics<parallel>], iteration_bounds = array<i64: 1, 2>, scalar_prefetch = 0 : i64, scratch_operands = 0 : i64, tpu.core_type = #tpu.core_type<tc>, window_params = [{transform_indices = @transform_0, window_bounds = array<i64: 8, 32>}, {transform_indices = @transform_1, window_bounds = array<i64: 32, 64>}, {transform_indices = @transform_2, window_bounds = array<i64: 1, 64>}, {transform_indices = @transform_3, window_bounds = array<i64: 8, 64>}]} {
    %c0 = arith.constant 0 : index
    %c0_0 = arith.constant 0 : index
    %0 = vector.load %arg2[%c0, %c0_0] : memref<8x32xf32, #tpu.memory_space<vmem>>, vector<8x32xf32>
    %c0_1 = arith.constant 0 : index
    %c0_2 = arith.constant 0 : index
    %1 = vector.load %arg3[%c0_1, %c0_2] : memref<32x64xf32, #tpu.memory_space<vmem>>, vector<32x64xf32>
    %cst = arith.constant dense<0.000000e+00> : vector<8x64xf32>
    %2 = tpu.matmul %0, %1, %cst {dimension_numbers = #tpu.dot_dimension_numbers<[1], [0], [0], [1], [0, 0, 1, 1], [], []>} : vector<8x32xf32>, vector<32x64xf32>, vector<8x64xf32> -> vector<8x64xf32>
    %c0_3 = arith.constant 0 : index
    %c0_4 = arith.constant 0 : index
    %3 = vector.load %arg4[%c0_3, %c0_4] : memref<1x64xf32, #tpu.memory_space<vmem>>, vector<1x64xf32>
    %4 = vector.broadcast %3 : vector<1x64xf32> to vector<8x64xf32>
    %5 = arith.addf %2, %4 : vector<8x64xf32>
    %6 = math.sin %5 : vector<8x64xf32>
    %c0_5 = arith.constant 0 : index
    %c0_6 = arith.constant 0 : index
    %7 = vector.load %arg5[%c0_5, %c0_6] : memref<8x64xf32, #tpu.memory_space<vmem>>, vector<8x64xf32>
    tpu.vector_store %arg5[%c0_5, %c0_6], %6 {strides = array<i32>} : memref<8x64xf32, #tpu.memory_space<vmem>>, vector<8x64xf32>,
    return
  }
  func.func @transform_0(%arg0: i32, %arg1: i32) -> (i32, i32) {
    %c0_i32 = arith.constant 0 : i32
    %c0_i32_0 = arith.constant 0 : i32
    return %arg1, %c0_i32 : i32, i32
  }
  func.func @transform_1(%arg0: i32, %arg1: i32) -> (i32, i32) {
    %c0_i32 = arith.constant 0 : i32
    %c0_i32_0 = arith.constant 0 : i32
    return %c0_i32, %arg0 : i32, i32
  }
  func.func @transform_2(%arg0: i32, %arg1: i32) -> (i32, i32) {
    %c0_i32 = arith.constant 0 : i32
    %c0_i32_0 = arith.constant 0 : i32
    return %c0_i32, %arg0 : i32, i32
  }
  func.func @transform_3(%arg0: i32, %arg1: i32) -> (i32, i32) {
    %c0_i32 = arith.constant 0 : i32
    return %arg1, %arg0 : i32, i32
  }
}

</mosaic_0001>

<llo_original>
// kernel: tpu_custom_call.1
$region0: #{tpu_custom_call.1}
  #allocation0 [shape = 'u32[]', space=smem, size = 0x4, offset = 0x4, fixed_abs, tag = 'smem constant byte address 0x4 - core index']
  #allocation1 [shape = 'u32[144,128]{1,0:T(1,128)}', space=vmem, size = 0x12000, scoped, tag = 'internal scratch']
  %s0 = inlined_call_operand.hbm [shape: f32[16,32], index: 0, kind: input, shape index: {}]
  %s1 = inlined_call_operand.hbm [shape: f32[32,64], index: 1, kind: input, shape index: {}]
  %s2 = inlined_call_operand.vmem [shape: f32[1,64], index: 2, kind: input, shape index: {}]
  %s3 = inlined_call_operand.hbm [shape: f32[16,64], index: 3, kind: output, shape index: {}]
  %s4 = sld [smem:[#allocation0]]
  $region53: #{tpu_custom_call.1} parent=0
    _
  %s6 = ssub.s32 1, %s4
  %s7 = scalar_select 0, %s6, %s4
  $region1: #{tpu_custom_call.1} parent=0
    #allocation2 [shape = 'u8[8192]{0}', space=vmem, size = 0x2000, scoped, tag = 'input window, operand 0']
    #allocation3 [shape = 's32[2]{0}', space=sflag, size = 0x8, scoped, tag = 'scoped memory for tpu_custom_call.1']
    #allocation4 [shape = 's32[2]{0}', space=sflag, size = 0x8, scoped, tag = 'scoped memory for tpu_custom_call.1']
    #allocation5 [shape = 'u8[16384]{0}', space=vmem, size = 0x4000, scoped, tag = 'input window, operand 1, single buffered']
    #allocation6 [shape = 's32[1]{0}', space=sflag, size = 0x4, scoped, tag = 'scoped memory for tpu_custom_call.1']
    #allocation7 [shape = 'u8[8192]{0}', space=vmem, size = 0x2000, scoped, tag = 'output window, operand 0']
    %8 = vsyncpa [#allocation3], 0
    %s9 = scalar_lea.sflag [#allocation3], 1
    %10 = vsyncpa %s9, 0
    %11 = vsyncpa [#allocation6], 0
    %12 = vsyncpa [#allocation4], 0
    %s13 = scalar_lea.sflag [#allocation4], 1
    %14 = vsyncpa %s13, 0
    loop: start=0, step=1, limit=4
    $region2: #{tpu_custom_call.1} parent=1 // loop_pre_header
      _
    $region3: #{tpu_custom_call.1} parent=1 // loop_header
      %s16 = sphi 0, %s20
      %p17 = scmp.ge.s32.totalorder %s16, 4
      %s23 = sphi 0, %s35
      %s24 = sphi 0, %s31
      %s25 = sphi 0, %s23
      %s26 = sphi 0, %s24
      %s27 = sphi 0, %s25
      %s28 = sphi 0, %s26
      %s38 = sphi 0, %s40
      %s41 = sphi 0, %s38
      %s42 = sphi 0, %s41
      %s58 = sphi 0, %s42
      %s64 = sphi 0, %s66
      %s67 = sphi 0, %s64
      %s68 = sphi 0, %s67
      %s84 = sphi 0, %s68
      %s90 = sphi 0, %s92
      %s93 = sphi 0, %s90
      %s94 = sphi 0, %s93
      %s110 = sphi 0, %s94
      %s118 = sphi 0, %s120
      %s121 = sphi 0, %s118
      %s122 = sphi 0, %s121
      %s138 = sphi 0, %s122
    $region4: #{tpu_custom_call.1} parent=1 // loop_header_branch
      %19 = sbr.rel (%p17) target = $region8
    $region5: #{tpu_custom_call.1} parent=1 // loop_body
      %s21 = ssub.s32 %s16, 1
      %s22 = ssub.s32 %s16, 2
      %s29 = sadd.s32 1, %s24
      %p30 = scmp.ge.s32.totalorder %s29, 2
      %s31 = scalar_select %p30, 0, %s29
      %s32 = sadd.s32 1, %s23
      %s33 = scalar_select %p30, %s32, %s23
      %p34 = scmp.ge.s32.totalorder %s33, 1
      %s35 = scalar_select %p34, 0, %s33
      %s36 = ssub.s32 %s24, %s31
      %p37 = scmp.eq.s32.totalorder %s36, 0
      %s39 = sadd.s32 %s38, 1
      %s40 = scalar_select %p37, %s38, %s39
      %p43 = pneg %p37
      %p44 = scmp.eq.s32.totalorder %s16, 1
      %p45 = por %p43, %p44
      %p46 = scmp.ne.s32.totalorder %s38, %s41
      %p47 = scmp.eq.s32.totalorder %s16, 0
      %p48 = por %p46, %p47
      %p49 = scmp.ne.s32.totalorder %s38, %s41
      %p50 = scmp.eq.s32.totalorder %s21, 1
      %p51 = por %p49, %p50
      %p52 = scmp.ne.s32.totalorder %s41, %s42
      %p53 = scmp.eq.s32.totalorder %s21, 0
      %p54 = por %p52, %p53
      %p55 = scmp.ne.s32.totalorder %s41, %s42
      %p56 = scmp.eq.s32.totalorder %s22, 1
      %p57 = por %p55, %p56
      %p59 = scmp.ne.s32.totalorder %s42, %s58
      %p60 = scmp.eq.s32.totalorder %s22, 0
      %p61 = por %p59, %p60
      %s62 = ssub.s32 %s23, %s35
      %p63 = scmp.eq.s32.totalorder %s62, 0
      %s65 = sadd.s32 %s64, 1
      %s66 = scalar_select %p63, %s64, %s65
      %p69 = pneg %p63
      %p70 = scmp.eq.s32.totalorder %s16, 1
      %p71 = por %p69, %p70
      %p72 = scmp.ne.s32.totalorder %s64, %s67
      %p73 = scmp.eq.s32.totalorder %s16, 0
      %p74 = por %p72, %p73
      %p75 = scmp.ne.s32.totalorder %s64, %s67
      %p76 = scmp.eq.s32.totalorder %s21, 1
      %p77 = por %p75, %p76
      %p78 = scmp.ne.s32.totalorder %s67, %s68
      %p79 = scmp.eq.s32.totalorder %s21, 0
      %p80 = por %p78, %p79
      %p81 = scmp.ne.s32.totalorder %s67, %s68
      %p82 = scmp.eq.s32.totalorder %s22, 1
      %p83 = por %p81, %p82
      %p85 = scmp.ne.s32.totalorder %s68, %s84
      %p86 = scmp.eq.s32.totalorder %s22, 0
      %p87 = por %p85, %p86
      %s88 = ssub.s32 %s23, %s35
      %p89 = scmp.eq.s32.totalorder %s88, 0
      %s91 = sadd.s32 %s90, 1
      %s92 = scalar_select %p89, %s90, %s91
      %p95 = pneg %p89
      %p96 = scmp.eq.s32.totalorder %s16, 1
      %p97 = por %p95, %p96
      %p98 = scmp.ne.s32.totalorder %s90, %s93
      %p99 = scmp.eq.s32.totalorder %s16, 0
      %p100 = por %p98, %p99
      %p101 = scmp.ne.s32.totalorder %s90, %s93
      %p102 = scmp.eq.s32.totalorder %s21, 1
      %p103 = por %p101, %p102
      %p104 = scmp.ne.s32.totalorder %s93, %s94
      %p105 = scmp.eq.s32.totalorder %s21, 0
      %p106 = por %p104, %p105
      %p107 = scmp.ne.s32.totalorder %s93, %s94
      %p108 = scmp.eq.s32.totalorder %s22, 1
      %p109 = por %p107, %p108
      %p111 = scmp.ne.s32.totalorder %s94, %s110
      %p112 = scmp.eq.s32.totalorder %s22, 0
      %p113 = por %p111, %p112
      %s114 = ssub.s32 %s24, %s31
      %s115 = ssub.s32 %s23, %s35
      %s116 = sor.u32 %s114, %s115
      %p117 = scmp.eq.s32.totalorder %s116, 0
      %s119 = sadd.s32 %s118, 1
      %s120 = scalar_select %p117, %s118, %s119
      %p123 = pneg %p117
      %p124 = scmp.eq.s32.totalorder %s16, 1
      %p125 = por %p123, %p124
      %p126 = scmp.ne.s32.totalorder %s118, %s121
      %p127 = scmp.eq.s32.totalorder %s16, 0
      %p128 = por %p126, %p127
      %p129 = scmp.ne.s32.totalorder %s118, %s121
      %p130 = scmp.eq.s32.totalorder %s21, 1
      %p131 = por %p129, %p130
      %p132 = scmp.ne.s32.totalorder %s121, %s122
      %p133 = scmp.eq.s32.totalorder %s21, 0
      %p134 = por %p132, %p133
      %p135 = scmp.ne.s32.totalorder %s121, %s122
      %p136 = scmp.eq.s32.totalorder %s22, 1
      %p137 = por %p135, %p136
      %p139 = scmp.ne.s32.totalorder %s122, %s138
      %p140 = scmp.eq.s32.totalorder %s22, 0
      %p141 = por %p139, %p140
      %p142 = scmp.le.s32.totalorder 1, %s16
      %p143 = scmp.lt.s32.totalorder %s16, 3
      %p144 = pnand %p142, %p143
      %p145 = pneg %p144
      // Predicated region
      $region9: #{tpu_custom_call.1} parent=5 // pred_check
        _
      $region10: #{tpu_custom_call.1} parent=5 // pred_check_branch
        %147 = sbr.rel (%p144) target = $region12
      $region11: #{tpu_custom_call.1} parent=5 // pred_region
        %s148 = ssub.s32 %s16, 1
        // Predicated region
        $region13: #{tpu_custom_call.1} parent=11 // pred_check
          %p149 = pneg %p80
        $region14: #{tpu_custom_call.1} parent=11 // pred_check_branch
          %151 = sbr.rel (%p149) target = $region16
        $region15: #{tpu_custom_call.1} parent=11 // pred_region
          %s153 = ssub.s32 512, 512
          %154 = vsyncadd [#allocation6], %s153
          %s155 = smul.addr %s25, 128
          %s156 = scalar_lea.hbm %s1, %s155
          %s157 = sshll.u32 [#allocation5], 4
          %s158 = int_to_ptr.vmem [resolvable:$true] %s157
          %163 = dma.hbm_to_vmem [thread:$0]  %s156, 512, %s158, [#allocation6], 128, 128, 8
        $region16: #{tpu_custom_call.1} parent=11 // pred_fallthru
          _
        // Predicated region
        $region17: #{tpu_custom_call.1} parent=11 // pred_check
          %p164 = pneg %p106
        $region18: #{tpu_custom_call.1} parent=11 // pred_check_branch
          %166 = sbr.rel (%p164) target = $region20
        $region19: #{tpu_custom_call.1} parent=11 // pred_region
          %p167 = scmp.lt.s32.totalorder %s25, 0
          %s168 = scalar_select %p167, %s25, 0
          %s169 = scalar_lea.vmem %s2, %s168
        $region20: #{tpu_custom_call.1} parent=11 // pred_fallthru
          _
      $region12: #{tpu_custom_call.1} parent=5 // pred_fallthru
        _
      %p170 = scmp.lt.s32.totalorder %s16, 2
      // Predicated region
      $region21: #{tpu_custom_call.1} parent=5 // pred_check
        %p171 = pneg %p170
      $region22: #{tpu_custom_call.1} parent=5 // pred_check_branch
        %173 = sbr.rel (%p171) target = $region24
      $region23: #{tpu_custom_call.1} parent=5 // pred_region
        // Predicated region
        $region25: #{tpu_custom_call.1} parent=23 // pred_check
          %p174 = pneg %p48
        $region26: #{tpu_custom_call.1} parent=23 // pred_check_branch
          %176 = sbr.rel (%p174) target = $region28
        $region27: #{tpu_custom_call.1} parent=23 // pred_region
          %s177 = sand.u32 %s38, 1
          %s178 = scalar_lea.sflag [#allocation3], %s177
          %s179 = sand.u32 %s38, 1
          %s180 = smul.addr %s179, 8
          %s181 = scalar_lea.vmem [#allocation2], %s180
          %s183 = ssub.s32 128, 128
          %184 = vsyncadd %s178, %s183
          %s185 = smul.addr %s24, 128
          %s186 = scalar_lea.hbm %s0, %s185
          %s188 = sshll.u32 %s181, 4
          %s189 = int_to_ptr.vmem [resolvable:$true] %s188
          %191 = dma.hbm_to_vmem [thread:$0]  %s186, 128, %s189, %s178
        $region28: #{tpu_custom_call.1} parent=23 // pred_fallthru
          _
      $region24: #{tpu_custom_call.1} parent=5 // pred_fallthru
        _
      %p192 = scmp.le.s32.totalorder 1, %s16
      %p193 = scmp.lt.s32.totalorder %s16, 3
      %p194 = pnand %p192, %p193
      %p195 = pneg %p194
      // Predicated region
      $region29: #{tpu_custom_call.1} parent=5 // pred_check
        _
      $region30: #{tpu_custom_call.1} parent=5 // pred_check_branch
        %197 = sbr.rel (%p194) target = $region32
      $region31: #{tpu_custom_call.1} parent=5 // pred_region
        %s198 = ssub.s32 %s16, 1
        %s199 = sand.u32 %s41, 1
        %s200 = scalar_lea.sflag [#allocation3], %s199
        %s201 = sand.u32 %s41, 1
        %s202 = smul.addr %s201, 8
        %s203 = scalar_lea.vmem [#allocation2], %s202
        // Predicated region
        $region33: #{tpu_custom_call.1} parent=31 // pred_check
          %p204 = pneg %p54
        $region34: #{tpu_custom_call.1} parent=31 // pred_check_branch
          %206 = sbr.rel (%p204) target = $region36
        $region35: #{tpu_custom_call.1} parent=31 // pred_region
          %207 = dma.done %s200, 128
        $region36: #{tpu_custom_call.1} parent=31 // pred_fallthru
          _
        // Predicated region
        $region37: #{tpu_custom_call.1} parent=31 // pred_check
          %p208 = pneg %p80
        $region38: #{tpu_custom_call.1} parent=31 // pred_check_branch
          %210 = sbr.rel (%p208) target = $region40
        $region39: #{tpu_custom_call.1} parent=31 // pred_region
          %211 = dma.done [#allocation6], 512
        $region40: #{tpu_custom_call.1} parent=31 // pred_fallthru
          _
        %s212 = sand.u32 %s41, 1
        %s213 = scalar_lea.sflag [#allocation3], %s212
        %s214 = sand.u32 %s41, 1
        %s215 = smul.addr %s214, 8
        %s216 = scalar_lea.vmem [#allocation2], %s215
        %p217 = pneg %p54
        %p218 = pneg %p51
        %p219 = pneg %p80
        %p220 = pneg %p77
        %p221 = scmp.lt.s32.totalorder %s25, 0
        %s222 = scalar_select %p221, %s25, 0
        %s223 = scalar_lea.vmem %s2, %s222
        %p224 = pneg %p106
        %p225 = pneg %p103
        %p226 = pneg %p134
        %p227 = pneg %p131
        %s228 = sand.u32 %s121, 1
        %s229 = scalar_lea.sflag [#allocation4], %s228
        %s230 = sand.u32 %s121, 1
        %s231 = smul.addr %s230, 8
        %s232 = scalar_lea.vmem [#allocation7], %s231
        %p233 = scmp.lt.s32.totalorder %s25, 0
        %s234 = scalar_select %p233, %s25, 0
        %s235 = scalar_lea.vmem %s2, %s234
        %v236 = vld [vmem:[%s203] sm:$0xff]
        %v237 = vld [vmem:[#allocation5] sm:$0xff]
        %v238 = vld [vmem:[#allocation5 + $0x8] sm:$0xff]
        %v239 = vld [vmem:[#allocation5 + $0x10] sm:$0xff]
        %v240 = vld [vmem:[#allocation5 + $0x18] sm:$0xff]
        %v241 = vld [vmem:[%s235] sm:$0x1]
        %v243 = vlaneseq
        %v244 = vshrl.u32 %v243, 7
        %v245 = vsub.s32 0, %v244
        %v246 = vrot.slane %v241, %v245
        %vm248 = vcmask 261120
        %v250 = vsel %vm248, %v236, 0
        %252 = vmatprep.subr.mxu0 0.0
        %253 = vmatpush1.msra.mxu0 %v237
        %254 = vmatprep.subr.mxu0 0.0
        %255 = vmatpush1.msra.mxu0 %v238
        %256 = vmatprep.subr.mxu0 0.0
        %257 = vmatpush1.msra.mxu0 %v239
        %258 = vmatprep.subr.mxu0 0.0
        %259 = vmatpush1.msra.mxu0 %v240
        %260 = vmatprep.subr.mxu0 0.0
        %261 = vmatpush1.msra.mxu0 0.0
        %262 = vmatprep.subr.mxu0 0.0
        %263 = vmatpush1.msra.mxu0 0.0
        %264 = vmatprep.subr.mxu0 0.0
        %265 = vmatpush1.msra.mxu0 0.0
        %266 = vmatprep.subr.mxu0 0.0
        %267 = vmatpush1.msra.mxu0 0.0
        %268 = vmatprep.subr.mxu0 0.0
        %269 = vmatpush1.msra.mxu0 0.0
        %270 = vmatprep.subr.mxu0 0.0
        %271 = vmatpush1.msra.mxu0 0.0
        %272 = vmatprep.subr.mxu0 0.0
        %273 = vmatpush1.msra.mxu0 0.0
        %274 = vmatprep.subr.mxu0 0.0
        %275 = vmatpush1.msra.mxu0 0.0
        %276 = vmatprep.subr.mxu0 0.0
        %277 = vmatpush1.msra.mxu0 0.0
        %278 = vmatprep.subr.mxu0 0.0
        %279 = vmatpush1.msra.mxu0 0.0
        %280 = vmatprep.subr.mxu0 0.0
        %281 = vmatpush1.msra.mxu0 0.0
        %282 = vmatprep.subr.mxu0 0.0
        %283 = vmatpush1.msra.mxu0 0.0
        %284 = vmatprep.subr.mxu0 0.0
        %285 = vmatpush1.msra.mxu0 0.0
        %286 = vmatprep.subr.mxu0 0.0
        %287 = vmatpush1.msra.mxu0 0.0
        %288 = vmatprep.subr.mxu0 0.0
        %289 = vmatpush1.msra.mxu0 0.0
        %290 = vmatprep.subr.mxu0 0.0
        %291 = vmatpush1.msra.mxu0 0.0
        %292 = vmatprep.subr.mxu0 0.0
        %293 = vmatpush1.msra.mxu0 0.0
        %294 = vmatprep.subr.mxu0 0.0
        %295 = vmatpush1.msra.mxu0 0.0
        %296 = vmatprep.subr.mxu0 0.0
        %297 = vmatpush1.msra.mxu0 0.0
        %298 = vmatprep.subr.mxu0 0.0
        %299 = vmatpush1.msra.mxu0 0.0
        %300 = vmatprep.subr.mxu0 0.0
        %301 = vmatpush1.msra.mxu0 0.0
        %302 = vmatprep.subr.mxu0 0.0
        %303 = vmatpush1.msra.mxu0 0.0
        %304 = vmatprep.subr.mxu0 0.0
        %305 = vmatpush1.msra.mxu0 0.0
        %306 = vmatprep.subr.mxu0 0.0
        %307 = vmatpush1.msra.mxu0 0.0
        %308 = vmatprep.subr.mxu0 0.0
        %309 = vmatpush1.msra.mxu0 0.0
        %310 = vmatprep.subr.mxu0 0.0
        %311 = vmatpush1.msra.mxu0 0.0
        %312 = vmatprep.subr.mxu0 0.0
        %313 = vmatpush1.msra.mxu0 0.0
        %314 = vmatprep.subr.mxu0 0.0
        %315 = vmatpush1.msra.mxu0 0.0
        %316 = vmatprep.mubr.f32.mxu0 0.0
        %317 = vmatmul.mubr.f32.gmra.mrb[0].mxu0 %v250
        %v318 = vpop.f32.mrb[0].mxu0
        %v319 = vadd.f32 %v246, %v318
        %v320 = vpop.f32.mrb[0].mxu0
        %321 = vdwg.mxu0
        %v322 = vand.u32 2147483647, %v319
        %vm323 = vcmp.le.f32.partialorder %v322, 0.7853982
        %vm324 = vcmp.lt.s32.totalorder %v319, 0
        %v325 = vand.u32 %v319, 2139095040
        %v326 = vshrl.u32 %v325, 23
        %v327 = vsub.s32 %v326, 127
        %v328 = vand.u32 2147483647, %v319
        %v329 = vand.u32 %v328, 8388607
        %v330 = vor.u32 %v329, 8388608
        %v331 = vsub.s32 0, %v330
        %v332 = vadd.s32 %v327, 1
        %vm333 = vcmp.gt.s32.totalorder %v332, 0
        %v334 = vsel %vm333, %v332, 0
        %v335 = vshrl.u32 %v334, 5
        %v336 = vand.u32 %v334, 31
        %v337 = vsub.s32 32, %v336
        %v338 = vshrl.u32 683565275, %v337
        %v339 = vshll.u32 683565275, %v336
        %v340 = vshrl.u32 2475754826, %v337
        %v341 = vor.u32 %v339, %v340
        %v342 = vshll.u32 2475754826, %v336
        %v343 = vshrl.u32 2131351028, %v337
        %v344 = vor.u32 %v342, %v343
        %v345 = vshll.u32 2131351028, %v336
        %v346 = vshrl.u32 2102212464, %v337
        %v347 = vor.u32 %v345, %v346
        %v348 = vshll.u32 2102212464, %v336
        %v349 = vshrl.u32 920167782, %v337
        %v350 = vor.u32 %v348, %v349
        %v351 = vshll.u32 920167782, %v336
        %v352 = vshrl.u32 1326507024, %v337
        %v353 = vor.u32 %v351, %v352
        %vm354 = vcmp.lt.s32.totalorder %v335, 1
        %vm355 = vcmp.lt.s32.totalorder %v335, 2
        %vm356 = vcmp.lt.s32.totalorder %v335, 3
        %vm357 = vcmp.lt.s32.totalorder %v335, 4
        %v358 = vsel %vm354, %v338, %v341
        %v359 = vsel %vm357, %v347, 2102212464
        %v360 = vsel %vm356, %v344, %v359
        %v361 = vsel %vm355, %v358, %v360
        %v362 = vsel %vm354, %v341, %v344
        %v363 = vsel %vm357, %v350, 920167782
        %v364 = vsel %vm356, %v347, %v363
        %v365 = vsel %vm355, %v362, %v364
        %v366 = vsel %vm354, %v344, %v347
        %v367 = vsel %vm357, %v353, 1326507024
        %v368 = vsel %vm356, %v350, %v367
        %v369 = vsel %vm355, %v366, %v368
        %v370 = vshll.u32 %v330, 8
        %v371 = vmul.u32.u64.compose %v370, %v369
        %v372 = vextract.low.u32 %v371
        %v373 = vextract.high.u32 %v371
        %v374 = vmul.u32.u64.compose %v370, %v365
        %v375 = vextract.low.u32 %v374
        %v376 = vextract.high.u32 %v374
        %v377 = vmul.u32 %v370, %v361
        %v378 = vadd.s32 %v373, %v375
        %vm379 = vc.u32 %v373, %v375
        %v380 = vadd.s32 %v376, 1
        %v381 = vsel %vm379, %v380, %v376
        %v382 = vadd.s32 %v377, %v381
        %v383 = vadd.s32 %v382, 536870912
        %v384 = vshrl.u32 %v383, 30
        %v385 = vshll.u32 %v384, 30
        %v386 = vsub.s32 %v382, %v385
        %vm387 = vcmp.lt.s32.totalorder %v386, 0
        %v388 = vsub.s32 0, %v386
        %v389 = vsel %vm387, %v388, %v386
        %v390 = vclz %v389
        %v391 = vsub.s32 %v390, 2
        %vm392 = vcmp.gt.s32.totalorder 0, %v391
        %v393 = vsel %vm392, 0, %v391
        %v394 = vsub.s32 32, %v393
        %v395 = vshll.u32 %v386, %v393
        %v396 = vshrl.u32 %v378, %v394
        %v397 = vor.u32 %v395, %v396
        %v398 = vsub.s32 4294967266, %v393
        %v399 = vadd.s32 %v398, 127
        %v400 = vshll.u32 %v399, 23
        %v401 = vor.u32 4788187, %v400
        %v402 = vand.u32 2147483647, %v401
        %v404 = vcvt.s32.f32 %v397
        %v405 = vmul.f32 %v404, %v402
        %v406 = vxor.u32 %v405, 2147483648
        %v407 = vsel %vm324, %v406, %v405
        %v408 = vsub.s32 4, %v384
        %v409 = vsel %vm324, %v408, %v384
        %v410 = vsel %vm323, %v319, %v407
        %v411 = vsel %vm323, 0, %v409
        %v412 = vcosq.f32.pop %v410
        %v413 = vsinq.f32.pop %v410
        %vm414 = vweird.f32 %v319
        %v415 = vadd.s32 %v411, 3
        %v416 = vand.u32 %v415, 3
        %vm417 = vcmp.lt.s32.totalorder %v416, 2
        %vm418 = vcmp.eq.s32.totalorder %v416, 0
        %v419 = vxor.u32 %v413, 2147483648
        %v420 = vsel %vm418, %v412, %v419
        %vm421 = vcmp.eq.s32.totalorder %v416, 2
        %v422 = vxor.u32 %v412, 2147483648
        %v423 = vsel %vm421, %v422, %v413
        %v424 = vsel %vm417, %v420, %v423
        %v425 = vsel %vm414, nan, %v424
        %vm426 = vcmask 523264
        %427 = vst.msk [vmem:[%s232] sm:$0xff] %vm426, %v425
        %s428 = sand.u32 %s121, 1
        %s429 = scalar_lea.sflag [#allocation4], %s428
        %s430 = sand.u32 %s121, 1
        %s431 = smul.addr %s430, 8
        %s432 = scalar_lea.vmem [#allocation7], %s431
        // Predicated region
        $region41: #{tpu_custom_call.1} parent=31 // pred_check
          %p433 = pneg %p131
        $region42: #{tpu_custom_call.1} parent=31 // pred_check_branch
          %435 = sbr.rel (%p433) target = $region44
        $region43: #{tpu_custom_call.1} parent=31 // pred_region
          %s437 = ssub.s32 128, 128
          %438 = vsyncadd %s429, %s437
          %s439 = sadd.s32 %s25, %s26
          %s440 = smul.addr %s439, 128
          %s441 = scalar_lea.hbm %s3, %s440
          %s443 = sshll.u32 %s432, 4
          %s444 = int_to_ptr.vmem [resolvable:$true] %s443
          %446 = dma.vmem_to_hbm [thread:$0]  %s444, 128, %s441, %s429
        $region44: #{tpu_custom_call.1} parent=31 // pred_fallthru
          _
      $region32: #{tpu_custom_call.1} parent=5 // pred_fallthru
        _
      %p447 = scmp.le.s32.totalorder 2, %s16
      // Predicated region
      $region45: #{tpu_custom_call.1} parent=5 // pred_check
        %p448 = pneg %p447
      $region46: #{tpu_custom_call.1} parent=5 // pred_check_branch
        %450 = sbr.rel (%p448) target = $region48
      $region47: #{tpu_custom_call.1} parent=5 // pred_region
        %s451 = ssub.s32 %s16, 2
        // Predicated region
        $region49: #{tpu_custom_call.1} parent=47 // pred_check
          %p452 = pneg %p137
        $region50: #{tpu_custom_call.1} parent=47 // pred_check_branch
          %454 = sbr.rel (%p452) target = $region52
        $region51: #{tpu_custom_call.1} parent=47 // pred_region
          %s455 = sand.u32 %s122, 1
          %s456 = scalar_lea.sflag [#allocation4], %s455
          %s457 = sand.u32 %s122, 1
          %s458 = smul.addr %s457, 8
          %s459 = scalar_lea.vmem [#allocation7], %s458
          %460 = dma.done %s456, 128
        $region52: #{tpu_custom_call.1} parent=47 // pred_fallthru
          _
      $region48: #{tpu_custom_call.1} parent=5 // pred_fallthru
        _
    $region6: #{tpu_custom_call.1} parent=1 // loop_footer
      %s20 = sadd.s32 1, %s16
    $region7: #{tpu_custom_call.1} parent=1 // loop_footer_branch
      %15 = sbr.rel target = $region3
    $region8: #{tpu_custom_call.1} parent=1 // loop_exit
      _
    %461 = vsyncpa [#allocation3], 1
    %s462 = scalar_lea.sflag [#allocation3], 1
    %463 = vsyncpa %s462, 1
    %464 = vsyncpa [#allocation6], 1
    %465 = vsyncpa [#allocation4], 1
    %s466 = scalar_lea.sflag [#allocation4], 1
    %467 = vsyncpa %s466, 1

</llo_original>
